<compile_context>
chip_gen: v7x
topology: tpu7x:2x2x1
jax: 0.10.0
libtpu: 0.0.40
codegen_flags: <defaults>
</compile_context>

<pallas_src>
import jax
import jax.numpy as jnp
from jax.experimental import pallas as pl
from jax.experimental.pallas import tpu as pltpu

HIDDEN = 256


# --------------------------------- kernel ------------------------------------

def _twin_q_compute(xs, xa, w1s, w1a, w2_ref, b, out_ref):
    """Shared body: xs/xa bf16 activations, w1s/w1a bf16 values, b f32 [4,2H]."""
    H = HIDDEN

    # ---- layer 1: both heads fused along the output/lane axis -> [B, 2H] ----
    h1 = (jnp.dot(xs, w1s, preferred_element_type=jnp.float32)
          + jnp.dot(xa, w1a, preferred_element_type=jnp.float32)
          + b[0:1, :])
    h1 = jnp.maximum(h1, 0.0).astype(jnp.bfloat16)                 # [B, 2H]

    # ---- layer 2: per-head, no [B, 2H] concat round trip ---------------------
    h2a = jnp.dot(h1[:, :H], w2_ref[0], preferred_element_type=jnp.float32)
    h2b = jnp.dot(h1[:, H:], w2_ref[1], preferred_element_type=jnp.float32)
    h2a = jnp.maximum(h2a + b[1:2, :H], 0.0)                       # [B, H] f32
    h2b = jnp.maximum(h2b + b[1:2, H:], 0.0)                       # [B, H] f32

    # ---- layer 3: degenerate [H,1] matmul -> VPU multiply + XLU lane reduce --
    # w3 lives in b[3, :]; scalar output biases in b[2, 0] / b[2, 1].
    q1 = jnp.sum(h2a * b[3:4, :H], axis=1, keepdims=True) + b[2:3, 0:1]
    q2 = jnp.sum(h2b * b[3:4, H:], axis=1, keepdims=True) + b[2:3, 1:2]

    # single lane-dense store of the packed [B, 2] result
    out_ref[...] = jnp.concatenate([q1, q2], axis=1)
    # TODO(synk): for the TD3 target path, min(q1, q2) could be fused here as a
    # [B, 1] output to save one more downstream XLA op.


def _make_td3_kernel(state_dim, fused_w1):
    if fused_w1:
        def kernel(state_ref, action_ref, w1_ref, w2_ref, b_ref, out_ref):
            xs = state_ref[...].astype(jnp.bfloat16)
            xa = action_ref[...].astype(jnp.bfloat16)
            b = b_ref[...]
            w1s = w1_ref[0:state_dim, :]        # static, tile-aligned row slice
            w1a = w1_ref[state_dim:, :]
            _twin_q_compute(xs, xa, w1s, w1a, w2_ref, b, out_ref)
    else:
        def kernel(state_ref, action_ref, w1s_ref, w1a_ref, w2_ref, b_ref,
                   out_ref):
            xs = state_ref[...].astype(jnp.bfloat16)
            xa = action_ref[...].astype(jnp.bfloat16)
            b = b_ref[...]
            _twin_q_compute(xs, xa, w1s_ref[...], w1a_ref[...], w2_ref, b,
                            out_ref)
    return kernel


# -------------------------------- wrapper -------------------------------------

def td3_critic_forward(state, action, packed, *, batch_tile=None):
    """Returns the packed [B, 2] Q-values (q1 in lane 0, q2 in lane 1)."""
    B, S = state.shape
    A = action.shape[1]
    assert S == packed["state_dim"]
    ops = packed["ops"]
    kernel = _make_td3_kernel(S, packed["fused"])
    out_shape = jax.ShapeDtypeStruct((B, 2), jnp.float32)
    vmem = pl.BlockSpec(memory_space=pltpu.MemorySpace.VMEM)

    if batch_tile is None or B <= batch_tile or B % batch_tile != 0:
        # Tiny / irregular batch: gridless single invocation, everything VMEM.
        return pl.pallas_call(
            kernel,
            out_shape=out_shape,
            in_specs=[vmem] * (2 + len(ops)),
            out_specs=vmem,
        )(state, action, *ops)

    # Large batch: tile batch, keep weights VMEM-resident across grid steps.
    def const_spec(arr):
        nd = arr.ndim
        return pl.BlockSpec(arr.shape, lambda i, nd=nd: (0,) * nd)

    in_specs = ([pl.BlockSpec((batch_tile, S), lambda i: (i, 0)),
                 pl.BlockSpec((batch_tile, A), lambda i: (i, 0))]
                + [const_spec(w) for w in ops])
    return pl.pallas_call(
        kernel,
        out_shape=out_shape,
        grid=(B // batch_tile,),
        in_specs=in_specs,
        out_specs=pl.BlockSpec((batch_tile, 2), lambda i: (i, 0)),
        compiler_params=pltpu.CompilerParams(
            dimension_semantics=("parallel",)),   # v7x: both TCs split batch
    )(state, action, *ops)


def td3_critic_forward_pair(state, action, packed, **kw):
    """Torch-API compatibility helper: returns (q1 [B,1], q2 [B,1])."""
    q = td3_critic_forward(state, action, packed, **kw)
    return q[:, 0:1], q[:, 1:2]


# ----------------------------- parameter setup -------------------------------

def init_linear(key, in_dim, out_dim):
    # Mirrors torch.nn.Linear's default uniform(-1/sqrt(in), 1/sqrt(in)) init.
    kw, kb = jax.random.split(key)
    bound = 1.0 / jnp.sqrt(jnp.float32(in_dim))
    w = jax.random.uniform(kw, (in_dim, out_dim), jnp.float32, -bound, bound)
    b = jax.random.uniform(kb, (1, out_dim), jnp.float32, -bound, bound)
    return w, b


def init_td3_critic(key, state_dim, action_dim, hidden=HIDDEN):
    d = state_dim + action_dim
    keys = jax.random.split(key, 6)
    q1 = (*init_linear(keys[0], d, hidden),
          *init_linear(keys[1], hidden, hidden),
          *init_linear(keys[2], hidden, 1))
    q2 = (*init_linear(keys[3], d, hidden),
          *init_linear(keys[4], hidden, hidden),
          *init_linear(keys[5], hidden, 1))
    return {"q1": q1, "q2": q2}


def pack_td3_params(params, state_dim):
    """One-time repack of the twin-Q weights into fused kernel operands."""
    w1a_, b1a, w2a, b2a, w3a, b3a = params["q1"]
    w1b_, b1b, w2b, b2b, w3b, b3b = params["q2"]
    H = w2a.shape[0]

    # layer 1: fuse the two heads along columns -> [D, 2H] bf16.
    w1 = jnp.concatenate([w1a_, w1b_], axis=1).astype(jnp.bfloat16)
    # layer 2: stack the two heads into one [2, H, H] bf16 operand.
    w2 = jnp.stack([w2a, w2b], axis=0).astype(jnp.bfloat16)
    # biases + layer-3 weights packed into one f32 [4, 2H] array.
    b = jnp.zeros((4, 2 * H), jnp.float32)
    b = b.at[0, :].set(jnp.concatenate([b1a[0], b1b[0]]))
    b = b.at[1, :].set(jnp.concatenate([b2a[0], b2b[0]]))
    b = b.at[2, 0].set(b3a[0, 0])
    b = b.at[2, 1].set(b3b[0, 0])
    b = b.at[3, :].set(jnp.concatenate([w3a[:, 0], w3b[:, 0]]))

    fused = (state_dim % 16 == 0)   # bf16 sublane pack -> free in-kernel split
    if fused:
        ops = (w1, w2, b)
    else:
        ops = (w1[:state_dim], w1[state_dim:], w2, b)
    return {"fused": fused, "state_dim": state_dim, "ops": ops}


# ------------------------------- references ----------------------------------

def _reference_mirrored(state, action, packed):
    """Pure-JAX forward with the exact same bf16/f32 mixed precision."""
    S = packed["state_dim"]
    if packed["fused"]:
        w1, w2, b = packed["ops"]
        w1s, w1a = w1[:S], w1[S:]
    else:
        w1s, w1a, w2, b = packed["ops"]
    H = HIDDEN
    xs = state.astype(jnp.bfloat16)
    xa = action.astype(jnp.bfloat16)
    h1 = (jnp.dot(xs, w1s, preferred_element_type=jnp.float32)
          + jnp.dot(xa, w1a, preferred_element_type=jnp.float32) + b[0:1, :])
    h1 = jnp.maximum(h1, 0.0).astype(jnp.bfloat16)
    h2a = jnp.maximum(jnp.dot(h1[:, :H], w2[0],
                              preferred_element_type=jnp.float32)
                      + b[1:2, :H], 0.0)
    h2b = jnp.maximum(jnp.dot(h1[:, H:], w2[1],
                              preferred_element_type=jnp.float32)
                      + b[1:2, H:], 0.0)
    q1 = jnp.sum(h2a * b[3:4, :H], axis=1, keepdims=True) + b[2:3, 0:1]
    q2 = jnp.sum(h2b * b[3:4, H:], axis=1, keepdims=True) + b[2:3, 1:2]
    return q1, q2


def _reference_f32(state, action, params):
    """Pure-f32 torch-semantics forward: q = L3(relu(L2(relu(L1(cat)))))."""
    sa = jnp.concatenate([state, action], axis=1)

    def mlp(p):
        w1, b1, w2, b2, w3, b3 = p
        h = jnp.maximum(sa @ w1 + b1, 0.0)
        h = jnp.maximum(h @ w2 + b2, 0.0)
        return h @ w3 + b3

    return mlp(params["q1"]), mlp(params["q2"])


# ---------------------------------- main --------------------------------------

if __name__ == "__main__":
    key = jax.random.PRNGKey(0)
    k_state, k_action, k_params, k_bs, k_ba = jax.random.split(key, 5)

    batch, state_dim, action_dim = 2, 16, 8
    state = jax.random.normal(k_state, (batch, state_dim), jnp.float32)
    action = jax.random.normal(k_action, (batch, action_dim), jnp.float32)

    params = init_td3_critic(k_params, state_dim, action_dim)
    packed = pack_td3_params(params, state_dim)   # one-time repack

    # tiny batch: gridless path
    q = td3_critic_forward(state, action, packed)
    jax.block_until_ready(q)
    assert q.shape == (batch, 2)

    # tight check vs a reference that mirrors the kernel's mixed precision
    r1, r2 = _reference_mirrored(state, action, packed)
    assert jnp.allclose(q[:, 0:1], r1, atol=1e-3, rtol=1e-3)
    assert jnp.allclose(q[:, 1:2], r2, atol=1e-3, rtol=1e-3)

    # loose sanity check vs the pure-f32 torch-style forward
    f1, f2 = _reference_f32(state, action, params)
    assert jnp.allclose(q[:, 0:1], f1, atol=1e-2, rtol=1e-2)
    assert jnp.allclose(q[:, 1:2], f2, atol=1e-2, rtol=1e-2)

    # torch-API compat helper still matches
    p1, p2 = td3_critic_forward_pair(state, action, packed)
    assert p1.shape == (batch, 1) and p2.shape == (batch, 1)

    # large batch: weight-resident batch grid (parallel over TCs on v7x)
    big_B = 256
    big_state = jax.random.normal(k_bs, (big_B, state_dim), jnp.float32)
    big_action = jax.random.normal(k_ba, (big_B, action_dim), jnp.float32)
    qb = td3_critic_forward(big_state, big_action, packed, batch_tile=128)
    jax.block_until_ready(qb)
    assert qb.shape == (big_B, 2)
    rb1, rb2 = _reference_mirrored(big_state, big_action, packed)
    assert jnp.allclose(qb[:, 0:1], rb1, atol=2e-3, rtol=2e-3)
    assert jnp.allclose(qb[:, 1:2], rb2, atol=2e-3, rtol=2e-3)

    print("KERNEL_OK")
</pallas_src>

<mosaic_0001>
module attributes {stable_mosaic.version = 11 : i64} {
  func.func @kernel(%arg0: memref<2x16xf32, #tpu.memory_space<vmem>>, %arg1: memref<2x8xf32, #tpu.memory_space<vmem>>, %arg2: memref<24x512xbf16, #tpu.memory_space<vmem>>, %arg3: memref<2x256x256xbf16, #tpu.memory_space<vmem>>, %arg4: memref<4x512xf32, #tpu.memory_space<vmem>>, %arg5: memref<2x2xf32, #tpu.memory_space<vmem>>) attributes {dimension_semantics = [], scalar_prefetch = 0 : i64, scratch_operands = 0 : i64, tpu.core_type = #tpu.core_type<tc>} {
    %c0 = arith.constant 0 : index
    %c0_0 = arith.constant 0 : index
    %0 = vector.load %arg0[%c0, %c0_0] : memref<2x16xf32, #tpu.memory_space<vmem>>, vector<2x16xf32>
    %1 = arith.truncf %0 : vector<2x16xf32> to vector<2x16xbf16>
    %c0_1 = arith.constant 0 : index
    %c0_2 = arith.constant 0 : index
    %2 = vector.load %arg1[%c0_1, %c0_2] : memref<2x8xf32, #tpu.memory_space<vmem>>, vector<2x8xf32>
    %3 = arith.truncf %2 : vector<2x8xf32> to vector<2x8xbf16>
    %c0_3 = arith.constant 0 : index
    %c0_4 = arith.constant 0 : index
    %4 = vector.load %arg4[%c0_3, %c0_4] : memref<4x512xf32, #tpu.memory_space<vmem>>, vector<4x512xf32>
    %c0_5 = arith.constant 0 : index
    %c0_6 = arith.constant 0 : index
    %5 = vector.load %arg2[%c0_5, %c0_6] : memref<24x512xbf16, #tpu.memory_space<vmem>>, vector<16x512xbf16>
    %c16 = arith.constant 16 : index
    %c0_7 = arith.constant 0 : index
    %6 = vector.load %arg2[%c16, %c0_7] : memref<24x512xbf16, #tpu.memory_space<vmem>>, vector<8x512xbf16>
    %cst = arith.constant dense<0.000000e+00> : vector<2x512xf32>
    %7 = tpu.matmul %1, %5, %cst {dimension_numbers = #tpu.dot_dimension_numbers<[1], [0], [0], [1], [0, 0, 1, 1], [], []>} : vector<2x16xbf16>, vector<16x512xbf16>, vector<2x512xf32> -> vector<2x512xf32>
    %cst_8 = arith.constant dense<0.000000e+00> : vector<2x512xf32>
    %8 = tpu.matmul %3, %6, %cst_8 {dimension_numbers = #tpu.dot_dimension_numbers<[1], [0], [0], [1], [0, 0, 1, 1], [], []>} : vector<2x8xbf16>, vector<8x512xbf16>, vector<2x512xf32> -> vector<2x512xf32>
    %9 = arith.addf %7, %8 : vector<2x512xf32>
    %10 = vector.extract_strided_slice %4 {offsets = [0, 0], sizes = [1, 512], strides = [1, 1]} : vector<4x512xf32> to vector<1x512xf32>
    %11 = vector.broadcast %10 : vector<1x512xf32> to vector<2x512xf32>
    %12 = arith.addf %9, %11 : vector<2x512xf32>
    %cst_9 = arith.constant 0.000000e+00 : f32
    %13 = vector.broadcast %cst_9 : f32 to vector<2x512xf32>
    %14 = arith.maximumf %12, %13 : vector<2x512xf32>
    %15 = arith.truncf %14 : vector<2x512xf32> to vector<2x512xbf16>
    %16 = vector.extract_strided_slice %15 {offsets = [0, 0], sizes = [2, 256], strides = [1, 1]} : vector<2x512xbf16> to vector<2x256xbf16>
    %c0_10 = arith.constant 0 : index
    %c0_11 = arith.constant 0 : index
    %c0_12 = arith.constant 0 : index
    %17 = vector.load %arg3[%c0_10, %c0_11, %c0_12] : memref<2x256x256xbf16, #tpu.memory_space<vmem>>, vector<1x256x256xbf16>
    %18 = vector.shape_cast %17 : vector<1x256x256xbf16> to vector<256x256xbf16>
    %cst_13 = arith.constant dense<0.000000e+00> : vector<2x256xf32>
    %19 = tpu.matmul %16, %18, %cst_13 {dimension_numbers = #tpu.dot_dimension_numbers<[1], [0], [0], [1], [0, 0, 1, 1], [], []>} : vector<2x256xbf16>, vector<256x256xbf16>, vector<2x256xf32> -> vector<2x256xf32>
    %20 = vector.extract_strided_slice %15 {offsets = [0, 256], sizes = [2, 256], strides = [1, 1]} : vector<2x512xbf16> to vector<2x256xbf16>
    %c1 = arith.constant 1 : index
    %c0_14 = arith.constant 0 : index
    %c0_15 = arith.constant 0 : index
    %21 = vector.load %arg3[%c1, %c0_14, %c0_15] : memref<2x256x256xbf16, #tpu.memory_space<vmem>>, vector<1x256x256xbf16>
    %22 = vector.shape_cast %21 : vector<1x256x256xbf16> to vector<256x256xbf16>
    %cst_16 = arith.constant dense<0.000000e+00> : vector<2x256xf32>
    %23 = tpu.matmul %20, %22, %cst_16 {dimension_numbers = #tpu.dot_dimension_numbers<[1], [0], [0], [1], [0, 0, 1, 1], [], []>} : vector<2x256xbf16>, vector<256x256xbf16>, vector<2x256xf32> -> vector<2x256xf32>
    %24 = vector.extract_strided_slice %4 {offsets = [1, 0], sizes = [1, 256], strides = [1, 1]} : vector<4x512xf32> to vector<1x256xf32>
    %25 = vector.broadcast %24 : vector<1x256xf32> to vector<2x256xf32>
    %26 = arith.addf %19, %25 : vector<2x256xf32>
    %cst_17 = arith.constant 0.000000e+00 : f32
    %27 = vector.broadcast %cst_17 : f32 to vector<2x256xf32>
    %28 = arith.maximumf %26, %27 : vector<2x256xf32>
    %29 = vector.extract_strided_slice %4 {offsets = [1, 256], sizes = [1, 256], strides = [1, 1]} : vector<4x512xf32> to vector<1x256xf32>
    %30 = vector.broadcast %29 : vector<1x256xf32> to vector<2x256xf32>
    %31 = arith.addf %23, %30 : vector<2x256xf32>
    %cst_18 = arith.constant 0.000000e+00 : f32
    %32 = vector.broadcast %cst_18 : f32 to vector<2x256xf32>
    %33 = arith.maximumf %31, %32 : vector<2x256xf32>
    %34 = vector.extract_strided_slice %4 {offsets = [3, 0], sizes = [1, 256], strides = [1, 1]} : vector<4x512xf32> to vector<1x256xf32>
    %35 = vector.broadcast %34 : vector<1x256xf32> to vector<2x256xf32>
    %36 = arith.mulf %28, %35 : vector<2x256xf32>
    %cst_19 = arith.constant dense<0.000000e+00> : vector<2xf32>
    %37 = vector.multi_reduction <add>, %36, %cst_19 [1] : vector<2x256xf32> to vector<2xf32>
    %38 = vector.shape_cast %37 : vector<2xf32> to vector<2x1xf32>
    %39 = vector.extract_strided_slice %4 {offsets = [2, 0], sizes = [1, 1], strides = [1, 1]} : vector<4x512xf32> to vector<1x1xf32>
    %40 = vector.broadcast %39 : vector<1x1xf32> to vector<2x1xf32>
    %41 = arith.addf %38, %40 : vector<2x1xf32>
    %42 = vector.extract_strided_slice %4 {offsets = [3, 256], sizes = [1, 256], strides = [1, 1]} : vector<4x512xf32> to vector<1x256xf32>
    %43 = vector.broadcast %42 : vector<1x256xf32> to vector<2x256xf32>
    %44 = arith.mulf %33, %43 : vector<2x256xf32>
    %cst_20 = arith.constant dense<0.000000e+00> : vector<2xf32>
    %45 = vector.multi_reduction <add>, %44, %cst_20 [1] : vector<2x256xf32> to vector<2xf32>
    %46 = vector.shape_cast %45 : vector<2xf32> to vector<2x1xf32>
    %47 = vector.extract_strided_slice %4 {offsets = [2, 1], sizes = [1, 1], strides = [1, 1]} : vector<4x512xf32> to vector<1x1xf32>
    %48 = vector.broadcast %47 : vector<1x1xf32> to vector<2x1xf32>
    %49 = arith.addf %46, %48 : vector<2x1xf32>
    %50 = tpu.concatenate %41, %49 in 1 : vector<2x1xf32>, vector<2x1xf32> -> vector<2x2xf32>
    %c0_21 = arith.constant 0 : index
    %c0_22 = arith.constant 0 : index
    %51 = vector.load %arg5[%c0_21, %c0_22] : memref<2x2xf32, #tpu.memory_space<vmem>>, vector<2x2xf32>
    tpu.vector_store %arg5[%c0_21, %c0_22], %50 {strides = array<i32>} : memref<2x2xf32, #tpu.memory_space<vmem>>, vector<2x2xf32>,
    return
  }
}

</mosaic_0001>

<llo_original>
// kernel: tpu_custom_call.1
$region0: #{tpu_custom_call.1}
  #allocation0 [shape = 'u32[]', space=smem, size = 0x4, offset = 0x4, fixed_abs, tag = 'smem constant byte address 0x4 - core index']
  #allocation1 [shape = 'u32[144,128]{1,0:T(1,128)}', space=vmem, size = 0x12000, scoped, tag = 'internal scratch']
  %s0 = inlined_call_operand.hbm [shape: f32[2,16], index: 0, kind: input, shape index: {}]
  %s1 = inlined_call_operand.vmem [shape: f32[2,8], index: 1, kind: input, shape index: {}]
  %s2 = inlined_call_operand.hbm [shape: bf16[24,512], index: 2, kind: input, shape index: {}]
  %s3 = inlined_call_operand.hbm [shape: bf16[2,256,256], index: 3, kind: input, shape index: {}]
  %s4 = inlined_call_operand.hbm [shape: f32[4,512], index: 4, kind: input, shape index: {}]
  %s5 = inlined_call_operand.hbm [shape: f32[2,2], index: 5, kind: output, shape index: {}]
  %s6 = sld [smem:[#allocation0]]
  $region46: #{tpu_custom_call.1} parent=0
    _
  %s8 = ssub.s32 1, %s6
  %s9 = scalar_select 0, %s8, %s6
  $region1: #{tpu_custom_call.1} parent=0
    #allocation2 [shape = 'u8[1024]{0}', space=vmem, size = 0x400, scoped, tag = 'input window, operand 0, single buffered']
    #allocation3 [shape = 's32[1]{0}', space=sflag, size = 0x4, scoped, tag = 'scoped memory for tpu_custom_call.1']
    #allocation4 [shape = 's32[1]{0}', space=sflag, size = 0x4, scoped, tag = 'scoped memory for tpu_custom_call.1']
    #allocation5 [shape = 'u8[24576]{0}', space=vmem, size = 0x6000, scoped, tag = 'input window, operand 2, single buffered']
    #allocation6 [shape = 's32[1]{0}', space=sflag, size = 0x4, scoped, tag = 'scoped memory for tpu_custom_call.1']
    #allocation7 [shape = 'u8[262144]{0}', space=vmem, size = 0x40000, scoped, tag = 'input window, operand 3, single buffered']
    #allocation8 [shape = 'u8[8192]{0}', space=vmem, size = 0x2000, scoped, tag = 'input window, operand 4, single buffered']
    #allocation9 [shape = 's32[1]{0}', space=sflag, size = 0x4, scoped, tag = 'scoped memory for tpu_custom_call.1']
    #allocation10 [shape = 'u8[1024]{0}', space=vmem, size = 0x400, scoped, tag = 'output window, operand 0, single buffered']
    %10 = vsyncpa [#allocation3], 0
    %11 = vsyncpa [#allocation6], 0
    %12 = vsyncpa [#allocation9], 0
    %13 = vsyncpa [#allocation4], 0
    // Predicated region
    $region2: #{tpu_custom_call.1} parent=1 // pred_check
      _
    $region3: #{tpu_custom_call.1} parent=1 // pred_check_branch
      %15 = sbr.rel (0) target = $region5
    $region4: #{tpu_custom_call.1} parent=1 // pred_region
      %s17 = ssub.s32 32, 32
      %18 = vsyncadd [#allocation3], %s17
      %s20 = sshll.u32 [#allocation2], 4
      %s21 = int_to_ptr.vmem [resolvable:$true] %s20
      %23 = dma.hbm_to_vmem [thread:$0]  %s0, 32, %s21, [#allocation3]
    $region5: #{tpu_custom_call.1} parent=1 // pred_fallthru
      _
    // Predicated region
    $region6: #{tpu_custom_call.1} parent=1 // pred_check
      _
    $region7: #{tpu_custom_call.1} parent=1 // pred_check_branch
      %25 = sbr.rel (0) target = $region9
    $region8: #{tpu_custom_call.1} parent=1 // pred_region
      _
    $region9: #{tpu_custom_call.1} parent=1 // pred_fallthru
      _
    // Predicated region
    $region10: #{tpu_custom_call.1} parent=1 // pred_check
      _
    $region11: #{tpu_custom_call.1} parent=1 // pred_check_branch
      %27 = sbr.rel (0) target = $region13
    $region12: #{tpu_custom_call.1} parent=1 // pred_region
      %s29 = ssub.s32 768, 768
      %30 = vsyncadd [#allocation6], %s29
      %s31 = sshll.u32 [#allocation5], 4
      %s32 = int_to_ptr.vmem [resolvable:$true] %s31
      %37 = dma.hbm_to_vmem [thread:$0]  %s2, 768, %s32, [#allocation6], 256, 256, 16
    $region13: #{tpu_custom_call.1} parent=1 // pred_fallthru
      _
    // Predicated region
    $region14: #{tpu_custom_call.1} parent=1 // pred_check
      _
    $region15: #{tpu_custom_call.1} parent=1 // pred_check_branch
      %39 = sbr.rel (0) target = $region17
    $region16: #{tpu_custom_call.1} parent=1 // pred_region
      %s41 = ssub.s32 8192, 8192
      %42 = vsyncadd [#allocation6], %s41
      %s43 = sshll.u32 [#allocation7], 4
      %s44 = int_to_ptr.vmem [resolvable:$true] %s43
      %49 = dma.hbm_to_vmem [thread:$0]  %s3, 8192, %s44, [#allocation6], 128, 128, 8
    $region17: #{tpu_custom_call.1} parent=1 // pred_fallthru
      _
    // Predicated region
    $region18: #{tpu_custom_call.1} parent=1 // pred_check
      _
    $region19: #{tpu_custom_call.1} parent=1 // pred_check_branch
      %51 = sbr.rel (0) target = $region21
    $region20: #{tpu_custom_call.1} parent=1 // pred_region
      %s53 = ssub.s32 256, 256
      %54 = vsyncadd [#allocation9], %s53
      %s56 = sshll.u32 [#allocation8], 4
      %s57 = int_to_ptr.vmem [resolvable:$true] %s56
      %59 = dma.hbm_to_vmem [thread:$0]  %s4, 256, %s57, [#allocation9]
    $region21: #{tpu_custom_call.1} parent=1 // pred_fallthru
      _
    // Predicated region
    $region22: #{tpu_custom_call.1} parent=1 // pred_check
      _
    $region23: #{tpu_custom_call.1} parent=1 // pred_check_branch
      %61 = sbr.rel (0) target = $region25
    $region24: #{tpu_custom_call.1} parent=1 // pred_region
      %62 = dma.done [#allocation3], 32
    $region25: #{tpu_custom_call.1} parent=1 // pred_fallthru
      _
    // Predicated region
    $region26: #{tpu_custom_call.1} parent=1 // pred_check
      _
    $region27: #{tpu_custom_call.1} parent=1 // pred_check_branch
      %64 = sbr.rel (0) target = $region29
    $region28: #{tpu_custom_call.1} parent=1 // pred_region
      %65 = dma.done [#allocation6], 768
    $region29: #{tpu_custom_call.1} parent=1 // pred_fallthru
      _
    // Predicated region
    $region30: #{tpu_custom_call.1} parent=1 // pred_check
      _
    $region31: #{tpu_custom_call.1} parent=1 // pred_check_branch
      %67 = sbr.rel (0) target = $region33
    $region32: #{tpu_custom_call.1} parent=1 // pred_region
      %68 = dma.done [#allocation6], 8192
    $region33: #{tpu_custom_call.1} parent=1 // pred_fallthru
      _
    // Predicated region
    $region34: #{tpu_custom_call.1} parent=1 // pred_check
      _
    $region35: #{tpu_custom_call.1} parent=1 // pred_check_branch
      %70 = sbr.rel (0) target = $region37
    $region36: #{tpu_custom_call.1} parent=1 // pred_region
      %71 = dma.done [#allocation9], 256
    $region37: #{tpu_custom_call.1} parent=1 // pred_fallthru
      _
    %v73 = vld [vmem:[#allocation2] sm:$0x3]
    %v74 = vpack.c.bf16 %v73, %v73
    %v75 = vld [vmem:[%s1] sm:$0x3]
    %v76 = vpack.c.bf16 %v75, %v75
    %v77 = vld [vmem:[#allocation8] sm:$0xff]
    %v78 = vld [vmem:[#allocation8 + $0x8] sm:$0xff]
    %v79 = vld [vmem:[#allocation5] sm:$0xff]
    %v80 = vld [vmem:[#allocation5 + $0x8] sm:$0xff]
    %v81 = vld [vmem:[#allocation5 + $0x10] sm:$0xff]
    %v82 = vld [vmem:[#allocation5 + $0x18] sm:$0xff]
    %v83 = vld [vmem:[#allocation5 + $0x20] sm:$0xff]
    %v84 = vld [vmem:[#allocation5 + $0x28] sm:$0xff]
    %v87 = vunpack.c.l.b16 %v83
    %v88 = vunpack.c.h.b16 %v83
    %v89 = vunpack.c.l.b16 %v84
    %v90 = vunpack.c.h.b16 %v84
    %v91 = vpack.c.b16 %v87, %v87
    %v92 = vpack.c.b16 %v88, %v88
    %v93 = vpack.c.b16 %v89, %v89
    %v94 = vpack.c.b16 %v90, %v90
    %vm95 = vcmask 64512
    %v97 = vsel %vm95, %v76, 0
    %vm99 = vcmask 1043456
    %v101 = vsel %vm99, %v91, 0
    %v104 = vsel %vm99, %v92, 0
    %v107 = vsel %vm99, %v93, 0
    %v110 = vsel %vm99, %v94, 0
    %112 = vmatprep.subr.bf16.mxu0 %v104
    %113 = vmatpush1.bf16.msra.mxu0 %v101
    %114 = vmatprep.subr.bf16.mxu0 0
    %115 = vmatpush1.bf16.msra.mxu0 0
    %116 = vmatprep.subr.bf16.mxu0 0
    %117 = vmatpush1.bf16.msra.mxu0 0
    %118 = vmatprep.subr.bf16.mxu0 0
    %119 = vmatpush1.bf16.msra.mxu0 0
    %120 = vmatprep.subr.bf16.mxu0 0
    %121 = vmatpush1.bf16.msra.mxu0 0
    %122 = vmatprep.subr.bf16.mxu0 0
    %123 = vmatpush1.bf16.msra.mxu0 0
    %124 = vmatprep.subr.bf16.mxu0 0
    %125 = vmatpush1.bf16.msra.mxu0 0
    %126 = vmatprep.subr.bf16.mxu0 0
    %127 = vmatpush1.bf16.msra.mxu0 0
    %128 = vmatprep.subr.bf16.mxu0 0
    %129 = vmatpush1.bf16.msra.mxu0 0
    %130 = vmatprep.subr.bf16.mxu0 0
    %131 = vmatpush1.bf16.msra.mxu0 0
    %132 = vmatprep.subr.bf16.mxu0 0
    %133 = vmatpush1.bf16.msra.mxu0 0
    %134 = vmatprep.subr.bf16.mxu0 0
    %135 = vmatpush1.bf16.msra.mxu0 0
    %136 = vmatprep.subr.bf16.mxu0 0
    %137 = vmatpush1.bf16.msra.mxu0 0
    %138 = vmatprep.subr.bf16.mxu0 0
    %139 = vmatpush1.bf16.msra.mxu0 0
    %140 = vmatprep.subr.bf16.mxu0 0
    %141 = vmatpush1.bf16.msra.mxu0 0
    %142 = vmatprep.subr.bf16.mxu0 0
    %143 = vmatpush1.bf16.msra.mxu0 0
    %144 = vmatprep.mubr.bf16.mxu0 0
    %145 = vmatmul.mubr.bf16.gmra.mrb[0].mxu0 %v97
    %v146 = vpop.f32.mrb[0].mxu0
    %v147 = vadd.f32 0.0, %v146
    %v148 = vpop.f32.mrb[0].mxu0
    %v149 = vadd.f32 0.0, %v148
    %v150 = vpop.f32.mrb[0].mxu0
    %v151 = vpop.f32.mrb[0].mxu0
    %152 = vdwg.mxu0
    %153 = vmatprep.subr.bf16.mxu0 %v110
    %154 = vmatpush1.bf16.msra.mxu0 %v107
    %155 = vmatprep.subr.bf16.mxu0 0
    %156 = vmatpush1.bf16.msra.mxu0 0
    %157 = vmatprep.subr.bf16.mxu0 0
    %158 = vmatpush1.bf16.msra.mxu0 0
    %159 = vmatprep.subr.bf16.mxu0 0
    %160 = vmatpush1.bf16.msra.mxu0 0
    %161 = vmatprep.subr.bf16.mxu0 0
    %162 = vmatpush1.bf16.msra.mxu0 0
    %163 = vmatprep.subr.bf16.mxu0 0
    %164 = vmatpush1.bf16.msra.mxu0 0
    %165 = vmatprep.subr.bf16.mxu0 0
    %166 = vmatpush1.bf16.msra.mxu0 0
    %167 = vmatprep.subr.bf16.mxu0 0
    %168 = vmatpush1.bf16.msra.mxu0 0
    %169 = vmatprep.subr.bf16.mxu0 0
    %170 = vmatpush1.bf16.msra.mxu0 0
    %171 = vmatprep.subr.bf16.mxu0 0
    %172 = vmatpush1.bf16.msra.mxu0 0
    %173 = vmatprep.subr.bf16.mxu0 0
    %174 = vmatpush1.bf16.msra.mxu0 0
    %175 = vmatprep.subr.bf16.mxu0 0
    %176 = vmatpush1.bf16.msra.mxu0 0
    %177 = vmatprep.subr.bf16.mxu0 0
    %178 = vmatpush1.bf16.msra.mxu0 0
    %179 = vmatprep.subr.bf16.mxu0 0
    %180 = vmatpush1.bf16.msra.mxu0 0
    %181 = vmatprep.subr.bf16.mxu0 0
    %182 = vmatpush1.bf16.msra.mxu0 0
    %183 = vmatprep.subr.bf16.mxu0 0
    %184 = vmatpush1.bf16.msra.mxu0 0
    %185 = vmatprep.mubr.bf16.mxu0 0
    %186 = vmatmul.mubr.bf16.gmra.mrb[0].mxu0 %v97
    %v187 = vpop.f32.mrb[0].mxu0
    %v188 = vadd.f32 0.0, %v187
    %v189 = vpop.f32.mrb[0].mxu0
    %v190 = vadd.f32 0.0, %v189
    %v191 = vpop.f32.mrb[0].mxu0
    %v192 = vpop.f32.mrb[0].mxu0
    %193 = vdwg.mxu0
    %v198 = vunpack.c.l.b16 %v79
    %v199 = vunpack.c.h.b16 %v79
    %v200 = vunpack.c.l.b16 %v80
    %v201 = vunpack.c.h.b16 %v80
    %v202 = vunpack.c.l.b16 %v81
    %v203 = vunpack.c.h.b16 %v81
    %v204 = vunpack.c.l.b16 %v82
    %v205 = vunpack.c.h.b16 %v82
    %v206 = vpack.c.b16 %v202, %v198
    %v207 = vpack.c.b16 %v203, %v199
    %v208 = vpack.c.b16 %v204, %v200
    %v209 = vpack.c.b16 %v205, %v201
    %vm214 = vcmask 130048
    %v216 = vsel %vm214, %v74, 0
    %218 = vmatprep.subr.bf16.mxu0 %v207
    %219 = vmatpush1.bf16.msra.mxu0 %v206
    %220 = vmatprep.subr.bf16.mxu0 0
    %221 = vmatpush1.bf16.msra.mxu0 0
    %222 = vmatprep.subr.bf16.mxu0 0
    %223 = vmatpush1.bf16.msra.mxu0 0
    %224 = vmatprep.subr.bf16.mxu0 0
    %225 = vmatpush1.bf16.msra.mxu0 0
    %226 = vmatprep.subr.bf16.mxu0 0
    %227 = vmatpush1.bf16.msra.mxu0 0
    %228 = vmatprep.subr.bf16.mxu0 0
    %229 = vmatpush1.bf16.msra.mxu0 0
    %230 = vmatprep.subr.bf16.mxu0 0
    %231 = vmatpush1.bf16.msra.mxu0 0
    %232 = vmatprep.subr.bf16.mxu0 0
    %233 = vmatpush1.bf16.msra.mxu0 0
    %234 = vmatprep.subr.bf16.mxu0 0
    %235 = vmatpush1.bf16.msra.mxu0 0
    %236 = vmatprep.subr.bf16.mxu0 0
    %237 = vmatpush1.bf16.msra.mxu0 0
    %238 = vmatprep.subr.bf16.mxu0 0
    %239 = vmatpush1.bf16.msra.mxu0 0
    %240 = vmatprep.subr.bf16.mxu0 0
    %241 = vmatpush1.bf16.msra.mxu0 0
    %242 = vmatprep.subr.bf16.mxu0 0
    %243 = vmatpush1.bf16.msra.mxu0 0
    %244 = vmatprep.subr.bf16.mxu0 0
    %245 = vmatpush1.bf16.msra.mxu0 0
    %246 = vmatprep.subr.bf16.mxu0 0
    %247 = vmatpush1.bf16.msra.mxu0 0
    %248 = vmatprep.subr.bf16.mxu0 0
    %249 = vmatpush1.bf16.msra.mxu0 0
    %250 = vmatprep.mubr.bf16.mxu0 0
    %251 = vmatmul.mubr.bf16.gmra.mrb[0].mxu0 %v216
    %v252 = vpop.f32.mrb[0].mxu0
    %v253 = vadd.f32 %v147, %v252
    %v254 = vpop.f32.mrb[0].mxu0
    %v255 = vadd.f32 %v149, %v254
    %v256 = vpop.f32.mrb[0].mxu0
    %v257 = vpop.f32.mrb[0].mxu0
    %258 = vdwg.mxu0
    %259 = vmatprep.subr.bf16.mxu0 %v209
    %260 = vmatpush1.bf16.msra.mxu0 %v208
    %261 = vmatprep.subr.bf16.mxu0 0
    %262 = vmatpush1.bf16.msra.mxu0 0
    %263 = vmatprep.subr.bf16.mxu0 0
    %264 = vmatpush1.bf16.msra.mxu0 0
    %265 = vmatprep.subr.bf16.mxu0 0
    %266 = vmatpush1.bf16.msra.mxu0 0
    %267 = vmatprep.subr.bf16.mxu0 0
    %268 = vmatpush1.bf16.msra.mxu0 0
    %269 = vmatprep.subr.bf16.mxu0 0
    %270 = vmatpush1.bf16.msra.mxu0 0
    %271 = vmatprep.subr.bf16.mxu0 0
    %272 = vmatpush1.bf16.msra.mxu0 0
    %273 = vmatprep.subr.bf16.mxu0 0
    %274 = vmatpush1.bf16.msra.mxu0 0
    %275 = vmatprep.subr.bf16.mxu0 0
    %276 = vmatpush1.bf16.msra.mxu0 0
    %277 = vmatprep.subr.bf16.mxu0 0
    %278 = vmatpush1.bf16.msra.mxu0 0
    %279 = vmatprep.subr.bf16.mxu0 0
    %280 = vmatpush1.bf16.msra.mxu0 0
    %281 = vmatprep.subr.bf16.mxu0 0
    %282 = vmatpush1.bf16.msra.mxu0 0
    %283 = vmatprep.subr.bf16.mxu0 0
    %284 = vmatpush1.bf16.msra.mxu0 0
    %285 = vmatprep.subr.bf16.mxu0 0
    %286 = vmatpush1.bf16.msra.mxu0 0
    %287 = vmatprep.subr.bf16.mxu0 0
    %288 = vmatpush1.bf16.msra.mxu0 0
    %289 = vmatprep.subr.bf16.mxu0 0
    %290 = vmatpush1.bf16.msra.mxu0 0
    %291 = vmatprep.mubr.bf16.mxu0 0
    %292 = vmatmul.mubr.bf16.gmra.mrb[0].mxu0 %v216
    %v293 = vpop.f32.mrb[0].mxu0
    %v294 = vadd.f32 %v188, %v293
    %v295 = vpop.f32.mrb[0].mxu0
    %v296 = vadd.f32 %v190, %v295
    %v297 = vpop.f32.mrb[0].mxu0
    %v298 = vpop.f32.mrb[0].mxu0
    %299 = vdwg.mxu0
    %v302 = vlaneseq
    %v303 = vshrl.u32 %v302, 7
    %v304 = vsub.s32 0, %v303
    %v305 = vrot.slane %v77, %v304
    %v306 = vlaneseq
    %v307 = vshrl.u32 %v306, 7
    %v308 = vsub.s32 4, %v307
    %v309 = vrot.slane %v77, %v308
    %v310 = vlaneseq
    %v311 = vshrl.u32 %v310, 7
    %v312 = vsub.s32 0, %v311
    %v313 = vrot.slane %v78, %v312
    %v314 = vlaneseq
    %v315 = vshrl.u32 %v314, 7
    %v316 = vsub.s32 4, %v315
    %v317 = vrot.slane %v78, %v316
    %v322 = vlaneseq
    %v323 = vshrl.u32 %v322, 7
    %v324 = vsub.s32 0, %v323
    %v325 = vrot.slane %v305, %v324
    %v326 = vlaneseq
    %v327 = vshrl.u32 %v326, 7
    %v328 = vsub.s32 0, %v327
    %v329 = vrot.slane %v309, %v328
    %v330 = vlaneseq
    %v331 = vshrl.u32 %v330, 7
    %v332 = vsub.s32 0, %v331
    %v333 = vrot.slane %v313, %v332
    %v334 = vlaneseq
    %v335 = vshrl.u32 %v334, 7
    %v336 = vsub.s32 0, %v335
    %v337 = vrot.slane %v317, %v336
    %v338 = vadd.f32 %v253, %v325
    %v339 = vadd.f32 %v255, %v329
    %v340 = vadd.f32 %v294, %v333
    %v341 = vadd.f32 %v296, %v337
    %v342 = vmax.f32 %v338, 0.0
    %v343 = vmax.f32 %v339, 0.0
    %v344 = vmax.f32 %v340, 0.0
    %v345 = vmax.f32 %v341, 0.0
    %v346 = vpack.c.bf16 %v342, %v342
    %v347 = vpack.c.bf16 %v343, %v343
    %v348 = vpack.c.bf16 %v344, %v344
    %v349 = vpack.c.bf16 %v345, %v345
    %v350 = vld [vmem:[#allocation7] sm:$0xff]
    %v351 = vld [vmem:[#allocation7 + $0x8] sm:$0xff]
    %v352 = vld [vmem:[#allocation7 + $0x10] sm:$0xff]
    %v353 = vld [vmem:[#allocation7 + $0x18] sm:$0xff]
    %v354 = vld [vmem:[#allocation7 + $0x20] sm:$0xff]
    %v355 = vld [vmem:[#allocation7 + $0x28] sm:$0xff]
    %v356 = vld [vmem:[#allocation7 + $0x30] sm:$0xff]
    %v357 = vld [vmem:[#allocation7 + $0x38] sm:$0xff]
    %v358 = vld [vmem:[#allocation7 + $0x40] sm:$0xff]
    %v359 = vld [vmem:[#allocation7 + $0x48] sm:$0xff]
    %v360 = vld [vmem:[#allocation7 + $0x50] sm:$0xff]
    %v361 = vld [vmem:[#allocation7 + $0x58] sm:$0xff]
    %v362 = vld [vmem:[#allocation7 + $0x60] sm:$0xff]
    %v363 = vld [vmem:[#allocation7 + $0x68] sm:$0xff]
    %v364 = vld [vmem:[#allocation7 + $0x70] sm:$0xff]
    %v365 = vld [vmem:[#allocation7 + $0x78] sm:$0xff]
    %v366 = vld [vmem:[#allocation7 + $0x80] sm:$0xff]
    %v367 = vld [vmem:[#allocation7 + $0x88] sm:$0xff]
    %v368 = vld [vmem:[#allocation7 + $0x90] sm:$0xff]
    %v369 = vld [vmem:[#allocation7 + $0x98] sm:$0xff]
    %v370 = vld [vmem:[#allocation7 + $0xa0] sm:$0xff]
    %v371 = vld [vmem:[#allocation7 + $0xa8] sm:$0xff]
    %v372 = vld [vmem:[#allocation7 + $0xb0] sm:$0xff]
    %v373 = vld [vmem:[#allocation7 + $0xb8] sm:$0xff]
    %v374 = vld [vmem:[#allocation7 + $0xc0] sm:$0xff]
    %v375 = vld [vmem:[#allocation7 + $0xc8] sm:$0xff]
    %v376 = vld [vmem:[#allocation7 + $0xd0] sm:$0xff]
    %v377 = vld [vmem:[#allocation7 + $0xd8] sm:$0xff]
    %v378 = vld [vmem:[#allocation7 + $0xe0] sm:$0xff]
    %v379 = vld [vmem:[#allocation7 + $0xe8] sm:$0xff]
    %v380 = vld [vmem:[#allocation7 + $0xf0] sm:$0xff]
    %v381 = vld [vmem:[#allocation7 + $0xf8] sm:$0xff]
    %s382 = scalar_lea.vmem [#allocation7], 256
    %v383 = vld [vmem:[%s382] sm:$0xff]
    %v384 = vld [vmem:[%s382 + $0x8] sm:$0xff]
    %v385 = vld [vmem:[%s382 + $0x10] sm:$0xff]
    %v386 = vld [vmem:[%s382 + $0x18] sm:$0xff]
    %v387 = vld [vmem:[%s382 + $0x20] sm:$0xff]
    %v388 = vld [vmem:[%s382 + $0x28] sm:$0xff]
    %v389 = vld [vmem:[%s382 + $0x30] sm:$0xff]
    %v390 = vld [vmem:[%s382 + $0x38] sm:$0xff]
    %v391 = vld [vmem:[%s382 + $0x40] sm:$0xff]
    %v392 = vld [vmem:[%s382 + $0x48] sm:$0xff]
    %v393 = vld [vmem:[%s382 + $0x50] sm:$0xff]
    %v394 = vld [vmem:[%s382 + $0x58] sm:$0xff]
    %v395 = vld [vmem:[%s382 + $0x60] sm:$0xff]
    %v396 = vld [vmem:[%s382 + $0x68] sm:$0xff]
    %v397 = vld [vmem:[%s382 + $0x70] sm:$0xff]
    %v398 = vld [vmem:[%s382 + $0x78] sm:$0xff]
    %v399 = vld [vmem:[%s382 + $0x80] sm:$0xff]
    %v400 = vld [vmem:[%s382 + $0x88] sm:$0xff]
    %v401 = vld [vmem:[%s382 + $0x90] sm:$0xff]
    %v402 = vld [vmem:[%s382 + $0x98] sm:$0xff]
    %v403 = vld [vmem:[%s382 + $0xa0] sm:$0xff]
    %v404 = vld [vmem:[%s382 + $0xa8] sm:$0xff]
    %v405 = vld [vmem:[%s382 + $0xb0] sm:$0xff]
    %v406 = vld [vmem:[%s382 + $0xb8] sm:$0xff]
    %v407 = vld [vmem:[%s382 + $0xc0] sm:$0xff]
    %v408 = vld [vmem:[%s382 + $0xc8] sm:$0xff]
    %v409 = vld [vmem:[%s382 + $0xd0] sm:$0xff]
    %v410 = vld [vmem:[%s382 + $0xd8] sm:$0xff]
    %v411 = vld [vmem:[%s382 + $0xe0] sm:$0xff]
    %v412 = vld [vmem:[%s382 + $0xe8] sm:$0xff]
    %v413 = vld [vmem:[%s382 + $0xf0] sm:$0xff]
    %v414 = vld [vmem:[%s382 + $0xf8] sm:$0xff]
    %v415 = vlaneseq
    %v416 = vshrl.u32 %v415, 7
    %v417 = vsub.s32 1, %v416
    %v418 = vrot.slane %v77, %v417
    %v419 = vlaneseq
    %v420 = vshrl.u32 %v419, 7
    %v421 = vsub.s32 5, %v420
    %v422 = vrot.slane %v77, %v421
    %v425 = vlaneseq
    %v426 = vshrl.u32 %v425, 7
    %v427 = vsub.s32 1, %v426
    %v428 = vrot.slane %v418, %v427
    %v429 = vlaneseq
    %v430 = vshrl.u32 %v429, 7
    %v431 = vsub.s32 1, %v430
    %v432 = vrot.slane %v422, %v431
    %v465 = vunpack.c.l.b16 %v350
    %v466 = vunpack.c.h.b16 %v350
    %v467 = vunpack.c.l.b16 %v351
    %v468 = vunpack.c.h.b16 %v351
    %v469 = vunpack.c.l.b16 %v352
    %v470 = vunpack.c.h.b16 %v352
    %v471 = vunpack.c.l.b16 %v353
    %v472 = vunpack.c.h.b16 %v353
    %v473 = vunpack.c.l.b16 %v354
    %v474 = vunpack.c.h.b16 %v354
    %v475 = vunpack.c.l.b16 %v355
    %v476 = vunpack.c.h.b16 %v355
    %v477 = vunpack.c.l.b16 %v356
    %v478 = vunpack.c.h.b16 %v356
    %v479 = vunpack.c.l.b16 %v357
    %v480 = vunpack.c.h.b16 %v357
    %v481 = vunpack.c.l.b16 %v358
    %v482 = vunpack.c.h.b16 %v358
    %v483 = vunpack.c.l.b16 %v359
    %v484 = vunpack.c.h.b16 %v359
    %v485 = vunpack.c.l.b16 %v360
    %v486 = vunpack.c.h.b16 %v360
    %v487 = vunpack.c.l.b16 %v361
    %v488 = vunpack.c.h.b16 %v361
    %v489 = vunpack.c.l.b16 %v362
    %v490 = vunpack.c.h.b16 %v362
    %v491 = vunpack.c.l.b16 %v363
    %v492 = vunpack.c.h.b16 %v363
    %v493 = vunpack.c.l.b16 %v364
    %v494 = vunpack.c.h.b16 %v364
    %v495 = vunpack.c.l.b16 %v365
    %v496 = vunpack.c.h.b16 %v365
    %v497 = vunpack.c.l.b16 %v366
    %v498 = vunpack.c.h.b16 %v366
    %v499 = vunpack.c.l.b16 %v367
    %v500 = vunpack.c.h.b16 %v367
    %v501 = vunpack.c.l.b16 %v368
    %v502 = vunpack.c.h.b16 %v368
    %v503 = vunpack.c.l.b16 %v369
    %v504 = vunpack.c.h.b16 %v369
    %v505 = vunpack.c.l.b16 %v370
    %v506 = vunpack.c.h.b16 %v370
    %v507 = vunpack.c.l.b16 %v371
    %v508 = vunpack.c.h.b16 %v371
    %v509 = vunpack.c.l.b16 %v372
    %v510 = vunpack.c.h.b16 %v372
    %v511 = vunpack.c.l.b16 %v373
    %v512 = vunpack.c.h.b16 %v373
    %v513 = vunpack.c.l.b16 %v374
    %v514 = vunpack.c.h.b16 %v374
    %v515 = vunpack.c.l.b16 %v375
    %v516 = vunpack.c.h.b16 %v375
    %v517 = vunpack.c.l.b16 %v376
    %v518 = vunpack.c.h.b16 %v376
    %v519 = vunpack.c.l.b16 %v377
    %v520 = vunpack.c.h.b16 %v377
    %v521 = vunpack.c.l.b16 %v378
    %v522 = vunpack.c.h.b16 %v378
    %v523 = vunpack.c.l.b16 %v379
    %v524 = vunpack.c.h.b16 %v379
    %v525 = vunpack.c.l.b16 %v380
    %v526 = vunpack.c.h.b16 %v380
    %v527 = vunpack.c.l.b16 %v381
    %v528 = vunpack.c.h.b16 %v381
    %v529 = vpack.c.b16 %v467, %v465
    %v530 = vpack.c.b16 %v468, %v466
    %v531 = vpack.c.b16 %v471, %v469
    %v532 = vpack.c.b16 %v472, %v470
    %v533 = vpack.c.b16 %v475, %v473
    %v534 = vpack.c.b16 %v476, %v474
    %v535 = vpack.c.b16 %v479, %v477
    %v536 = vpack.c.b16 %v480, %v478
    %v537 = vpack.c.b16 %v483, %v481
    %v538 = vpack.c.b16 %v484, %v482
    %v539 = vpack.c.b16 %v487, %v485
    %v540 = vpack.c.b16 %v488, %v486
    %v541 = vpack.c.b16 %v491, %v489
    %v542 = vpack.c.b16 %v492, %v490
    %v543 = vpack.c.b16 %v495, %v493
    %v544 = vpack.c.b16 %v496, %v494
    %v545 = vpack.c.b16 %v499, %v497
    %v546 = vpack.c.b16 %v500, %v498
    %v547 = vpack.c.b16 %v503, %v501
    %v548 = vpack.c.b16 %v504, %v502
    %v549 = vpack.c.b16 %v507, %v505
    %v550 = vpack.c.b16 %v508, %v506
    %v551 = vpack.c.b16 %v511, %v509
    %v552 = vpack.c.b16 %v512, %v510
    %v553 = vpack.c.b16 %v515, %v513
    %v554 = vpack.c.b16 %v516, %v514
    %v555 = vpack.c.b16 %v519, %v517
    %v556 = vpack.c.b16 %v520, %v518
    %v557 = vpack.c.b16 %v523, %v521
    %v558 = vpack.c.b16 %v524, %v522
    %v559 = vpack.c.b16 %v527, %v525
    %v560 = vpack.c.b16 %v528, %v526
    %593 = vmatprep.subr.bf16.mxu0 %v530
    %594 = vmatpush1.bf16.msra.mxu0 %v529
    %595 = vmatprep.subr.bf16.mxu0 %v532
    %596 = vmatpush1.bf16.msra.mxu0 %v531
    %597 = vmatprep.subr.bf16.mxu0 %v534
    %598 = vmatpush1.bf16.msra.mxu0 %v533
    %599 = vmatprep.subr.bf16.mxu0 %v536
    %600 = vmatpush1.bf16.msra.mxu0 %v535
    %601 = vmatprep.subr.bf16.mxu0 %v538
    %602 = vmatpush1.bf16.msra.mxu0 %v537
    %603 = vmatprep.subr.bf16.mxu0 %v540
    %604 = vmatpush1.bf16.msra.mxu0 %v539
    %605 = vmatprep.subr.bf16.mxu0 %v542
    %606 = vmatpush1.bf16.msra.mxu0 %v541
    %607 = vmatprep.subr.bf16.mxu0 %v544
    %608 = vmatpush1.bf16.msra.mxu0 %v543
    %609 = vmatprep.subr.bf16.mxu0 %v546
    %610 = vmatpush1.bf16.msra.mxu0 %v545
    %611 = vmatprep.subr.bf16.mxu0 %v548
    %612 = vmatpush1.bf16.msra.mxu0 %v547
    %613 = vmatprep.subr.bf16.mxu0 %v550
    %614 = vmatpush1.bf16.msra.mxu0 %v549
    %615 = vmatprep.subr.bf16.mxu0 %v552
    %616 = vmatpush1.bf16.msra.mxu0 %v551
    %617 = vmatprep.subr.bf16.mxu0 %v554
    %618 = vmatpush1.bf16.msra.mxu0 %v553
    %619 = vmatprep.subr.bf16.mxu0 %v556
    %620 = vmatpush1.bf16.msra.mxu0 %v555
    %621 = vmatprep.subr.bf16.mxu0 %v558
    %622 = vmatpush1.bf16.msra.mxu0 %v557
    %623 = vmatprep.subr.bf16.mxu0 %v560
    %624 = vmatpush1.bf16.msra.mxu0 %v559
    %625 = vmatprep.mubr.bf16.mxu0 %v347
    %626 = vmatmul.mubr.bf16.gmra.mrb[0].mxu0 %v346
    %v627 = vpop.f32.mrb[0].mxu0
    %v628 = vadd.f32 %v428, %v627
    %v629 = vpop.f32.mrb[0].mxu0
    %v630 = vadd.f32 %v432, %v629
    %v631 = vpop.f32.mrb[0].mxu0
    %v632 = vpop.f32.mrb[0].mxu0
    %633 = vdwg.mxu0
    %v634 = vmax.f32 %v628, 0.0
    %v635 = vmax.f32 %v630, 0.0
    %v636 = vlaneseq
    %v637 = vshrl.u32 %v636, 7
    %v638 = vsub.s32 1, %v637
    %v639 = vrot.slane %v78, %v638
    %v640 = vlaneseq
    %v641 = vshrl.u32 %v640, 7
    %v642 = vsub.s32 5, %v641
    %v643 = vrot.slane %v78, %v642
    %v646 = vlaneseq
    %v647 = vshrl.u32 %v646, 7
    %v648 = vsub.s32 1, %v647
    %v649 = vrot.slane %v639, %v648
    %v650 = vlaneseq
    %v651 = vshrl.u32 %v650, 7
    %v652 = vsub.s32 1, %v651
    %v653 = vrot.slane %v643, %v652
    %v686 = vunpack.c.l.b16 %v383
    %v687 = vunpack.c.h.b16 %v383
    %v688 = vunpack.c.l.b16 %v384
    %v689 = vunpack.c.h.b16 %v384
    %v690 = vunpack.c.l.b16 %v385
    %v691 = vunpack.c.h.b16 %v385
    %v692 = vunpack.c.l.b16 %v386
    %v693 = vunpack.c.h.b16 %v386
    %v694 = vunpack.c.l.b16 %v387
    %v695 = vunpack.c.h.b16 %v387
    %v696 = vunpack.c.l.b16 %v388
    %v697 = vunpack.c.h.b16 %v388
    %v698 = vunpack.c.l.b16 %v389
    %v699 = vunpack.c.h.b16 %v389
    %v700 = vunpack.c.l.b16 %v390
    %v701 = vunpack.c.h.b16 %v390
    %v702 = vunpack.c.l.b16 %v391
    %v703 = vunpack.c.h.b16 %v391
    %v704 = vunpack.c.l.b16 %v392
    %v705 = vunpack.c.h.b16 %v392
    %v706 = vunpack.c.l.b16 %v393
    %v707 = vunpack.c.h.b16 %v393
    %v708 = vunpack.c.l.b16 %v394
    %v709 = vunpack.c.h.b16 %v394
    %v710 = vunpack.c.l.b16 %v395
    %v711 = vunpack.c.h.b16 %v395
    %v712 = vunpack.c.l.b16 %v396
    %v713 = vunpack.c.h.b16 %v396
    %v714 = vunpack.c.l.b16 %v397
    %v715 = vunpack.c.h.b16 %v397
    %v716 = vunpack.c.l.b16 %v398
    %v717 = vunpack.c.h.b16 %v398
    %v718 = vunpack.c.l.b16 %v399
    %v719 = vunpack.c.h.b16 %v399
    %v720 = vunpack.c.l.b16 %v400
    %v721 = vunpack.c.h.b16 %v400
    %v722 = vunpack.c.l.b16 %v401
    %v723 = vunpack.c.h.b16 %v401
    %v724 = vunpack.c.l.b16 %v402
    %v725 = vunpack.c.h.b16 %v402
    %v726 = vunpack.c.l.b16 %v403
    %v727 = vunpack.c.h.b16 %v403
    %v728 = vunpack.c.l.b16 %v404
    %v729 = vunpack.c.h.b16 %v404
    %v730 = vunpack.c.l.b16 %v405
    %v731 = vunpack.c.h.b16 %v405
    %v732 = vunpack.c.l.b16 %v406
    %v733 = vunpack.c.h.b16 %v406
    %v734 = vunpack.c.l.b16 %v407
    %v735 = vunpack.c.h.b16 %v407
    %v736 = vunpack.c.l.b16 %v408
    %v737 = vunpack.c.h.b16 %v408
    %v738 = vunpack.c.l.b16 %v409
    %v739 = vunpack.c.h.b16 %v409
    %v740 = vunpack.c.l.b16 %v410
    %v741 = vunpack.c.h.b16 %v410
    %v742 = vunpack.c.l.b16 %v411
    %v743 = vunpack.c.h.b16 %v411
    %v744 = vunpack.c.l.b16 %v412
    %v745 = vunpack.c.h.b16 %v412
    %v746 = vunpack.c.l.b16 %v413
    %v747 = vunpack.c.h.b16 %v413
    %v748 = vunpack.c.l.b16 %v414
    %v749 = vunpack.c.h.b16 %v414
    %v750 = vpack.c.b16 %v688, %v686
    %v751 = vpack.c.b16 %v689, %v687
    %v752 = vpack.c.b16 %v692, %v690
    %v753 = vpack.c.b16 %v693, %v691
    %v754 = vpack.c.b16 %v696, %v694
    %v755 = vpack.c.b16 %v697, %v695
    %v756 = vpack.c.b16 %v700, %v698
    %v757 = vpack.c.b16 %v701, %v699
    %v758 = vpack.c.b16 %v704, %v702
    %v759 = vpack.c.b16 %v705, %v703
    %v760 = vpack.c.b16 %v708, %v706
    %v761 = vpack.c.b16 %v709, %v707
    %v762 = vpack.c.b16 %v712, %v710
    %v763 = vpack.c.b16 %v713, %v711
    %v764 = vpack.c.b16 %v716, %v714
    %v765 = vpack.c.b16 %v717, %v715
    %v766 = vpack.c.b16 %v720, %v718
    %v767 = vpack.c.b16 %v721, %v719
    %v768 = vpack.c.b16 %v724, %v722
    %v769 = vpack.c.b16 %v725, %v723
    %v770 = vpack.c.b16 %v728, %v726
    %v771 = vpack.c.b16 %v729, %v727
    %v772 = vpack.c.b16 %v732, %v730
    %v773 = vpack.c.b16 %v733, %v731
    %v774 = vpack.c.b16 %v736, %v734
    %v775 = vpack.c.b16 %v737, %v735
    %v776 = vpack.c.b16 %v740, %v738
    %v777 = vpack.c.b16 %v741, %v739
    %v778 = vpack.c.b16 %v744, %v742
    %v779 = vpack.c.b16 %v745, %v743
    %v780 = vpack.c.b16 %v748, %v746
    %v781 = vpack.c.b16 %v749, %v747
    %814 = vmatprep.subr.bf16.mxu0 %v751
    %815 = vmatpush1.bf16.msra.mxu0 %v750
    %816 = vmatprep.subr.bf16.mxu0 %v753
    %817 = vmatpush1.bf16.msra.mxu0 %v752
    %818 = vmatprep.subr.bf16.mxu0 %v755
    %819 = vmatpush1.bf16.msra.mxu0 %v754
    %820 = vmatprep.subr.bf16.mxu0 %v757
    %821 = vmatpush1.bf16.msra.mxu0 %v756
    %822 = vmatprep.subr.bf16.mxu0 %v759
    %823 = vmatpush1.bf16.msra.mxu0 %v758
    %824 = vmatprep.subr.bf16.mxu0 %v761
    %825 = vmatpush1.bf16.msra.mxu0 %v760
    %826 = vmatprep.subr.bf16.mxu0 %v763
    %827 = vmatpush1.bf16.msra.mxu0 %v762
    %828 = vmatprep.subr.bf16.mxu0 %v765
    %829 = vmatpush1.bf16.msra.mxu0 %v764
    %830 = vmatprep.subr.bf16.mxu0 %v767
    %831 = vmatpush1.bf16.msra.mxu0 %v766
    %832 = vmatprep.subr.bf16.mxu0 %v769
    %833 = vmatpush1.bf16.msra.mxu0 %v768
    %834 = vmatprep.subr.bf16.mxu0 %v771
    %835 = vmatpush1.bf16.msra.mxu0 %v770
    %836 = vmatprep.subr.bf16.mxu0 %v773
    %837 = vmatpush1.bf16.msra.mxu0 %v772
    %838 = vmatprep.subr.bf16.mxu0 %v775
    %839 = vmatpush1.bf16.msra.mxu0 %v774
    %840 = vmatprep.subr.bf16.mxu0 %v777
    %841 = vmatpush1.bf16.msra.mxu0 %v776
    %842 = vmatprep.subr.bf16.mxu0 %v779
    %843 = vmatpush1.bf16.msra.mxu0 %v778
    %844 = vmatprep.subr.bf16.mxu0 %v781
    %845 = vmatpush1.bf16.msra.mxu0 %v780
    %846 = vmatprep.mubr.bf16.mxu0 %v349
    %847 = vmatmul.mubr.bf16.gmra.mrb[0].mxu0 %v348
    %v848 = vpop.f32.mrb[0].mxu0
    %v849 = vadd.f32 %v649, %v848
    %v850 = vpop.f32.mrb[0].mxu0
    %v851 = vadd.f32 %v653, %v850
    %v852 = vpop.f32.mrb[0].mxu0
    %v853 = vpop.f32.mrb[0].mxu0
    %854 = vdwg.mxu0
    %v855 = vmax.f32 %v849, 0.0
    %v856 = vmax.f32 %v851, 0.0
    %v857 = vlaneseq
    %v858 = vshrl.u32 %v857, 7
    %v859 = vsub.s32 3, %v858
    %v860 = vrot.slane %v77, %v859
    %v861 = vlaneseq
    %v862 = vshrl.u32 %v861, 7
    %v863 = vsub.s32 7, %v862
    %v864 = vrot.slane %v77, %v863
    %v867 = vlaneseq
    %v868 = vshrl.u32 %v867, 7
    %v869 = vsub.s32 3, %v868
    %v870 = vrot.slane %v860, %v869
    %v871 = vlaneseq
    %v872 = vshrl.u32 %v871, 7
    %v873 = vsub.s32 3, %v872
    %v874 = vrot.slane %v864, %v873
    %v875 = vmul.f32 %v634, %v870
    %v876 = vmul.f32 %v635, %v874
    %vm877 = vcmask 1041408
    %v878 = vsel %vm877, %v875, 0.0
    %v879 = vsel %vm877, %v876, 0.0
    %v880 = vadd.f32 %v878, %v879
    %881 = vadd.xlane.f32.xlu0 %v880
    %v882 = vpop.xlane.xlu0 %881
    %v883 = vlaneseq
    %v884 = vshrl.u32 %v883, 7
    %v885 = vsub.s32 2, %v884
    %v886 = vrot.slane %v77, %v885
    %v887 = vadd.f32 %v882, %v886
    %v888 = vlaneseq
    %v889 = vshrl.u32 %v888, 7
    %v890 = vsub.s32 3, %v889
    %v891 = vrot.slane %v78, %v890
    %v892 = vlaneseq
    %v893 = vshrl.u32 %v892, 7
    %v894 = vsub.s32 7, %v893
    %v895 = vrot.slane %v78, %v894
    %v898 = vlaneseq
    %v899 = vshrl.u32 %v898, 7
    %v900 = vsub.s32 3, %v899
    %v901 = vrot.slane %v891, %v900
    %v902 = vlaneseq
    %v903 = vshrl.u32 %v902, 7
    %v904 = vsub.s32 3, %v903
    %v905 = vrot.slane %v895, %v904
    %v906 = vmul.f32 %v855, %v901
    %v907 = vmul.f32 %v856, %v905
    %v908 = vsel %vm877, %v906, 0.0
    %v909 = vsel %vm877, %v907, 0.0
    %v910 = vadd.f32 %v908, %v909
    %911 = vadd.xlane.f32.xlu0 %v910
    %v912 = vpop.xlane.xlu0 %911
    %v913 = vadd.f32 %v912, %v886
    %vm914 = vcmask 7168
    %v915 = vsel %vm914, %v887, %v913
    %vm916 = vcmask 9216
    %917 = vst.msk [vmem:[#allocation10] sm:$0x3] %vm916, %v915
    // Predicated region
    $region38: #{tpu_custom_call.1} parent=1 // pred_check
      _
    $region39: #{tpu_custom_call.1} parent=1 // pred_check_branch
      %919 = sbr.rel (0) target = $region41
    $region40: #{tpu_custom_call.1} parent=1 // pred_region
      %s921 = ssub.s32 32, 32
      %922 = vsyncadd [#allocation4], %s921
      %s924 = sshll.u32 [#allocation10], 4
      %s925 = int_to_ptr.vmem [resolvable:$true] %s924
      %927 = dma.vmem_to_hbm [thread:$0]  %s925, 32, %s5, [#allocation4]
    $region41: #{tpu_custom_call.1} parent=1 // pred_fallthru
      _
    // Predicated region
    $region42: #{tpu_custom_call.1} parent=1 // pred_check
      _
    $region43: #{tpu_custom_call.1} parent=1 // pred_check_branch
      %929 = sbr.rel (0) target = $region45
    $region44: #{tpu_custom_call.1} parent=1 // pred_region
      %930 = dma.done [#allocation4], 32
    $region45: #{tpu_custom_call.1} parent=1 // pred_fallthru
      _
    %931 = vsyncpa [#allocation3], 1
    %932 = vsyncpa [#allocation6], 1
    %933 = vsyncpa [#allocation9], 1
    %934 = vsyncpa [#allocation4], 1

</llo_original>
